<compile_context>
chip_gen: v5e
topology: v5e:2x2
jax: 0.10.0
libtpu: 0.0.40
codegen_flags: <defaults>
</compile_context>

<pallas_src>
import jax
import jax.numpy as jnp
from jax.experimental import pallas as pl
from jax.experimental.pallas import tpu as pltpu


def _pick_thw(hw, c, per_buffer_bytes=4 * 1024 * 1024):
    """Largest multiple-of-128 HW tile such that a double-buffered (1, C, THW)
    f32 x-tile stays well inside the scoped VMEM default on v5e/v6e/v7x."""
    cap = max(128, (per_buffer_bytes // (c * 4)) // 128 * 128)
    cap = min(cap, 2048)                       # >=512 lanes amortizes per-step overhead
    hw_128 = pl.cdiv(hw, 128) * 128
    return min(cap, hw_128)


def _make_mla_kernel(hw_true, thw, need_mask):
    """Build the kernel with static constants baked in (1/HW, chunk count, masking)."""
    inv_hw = 1.0 / float(hw_true)
    n_lane_chunks = thw // 128

    def kernel(x_ref, w1_ref, w2_ref, out_ref, acc_ref):
        # x_ref  : (1, C, THW)  f32   spatial tile of one batch element
        # w1_ref : (C, L*D)     f32   fc_latents.weight, pre-transposed
        # w2_ref : (L*D, C)     f32   mean-over-latents folded into fc_combine
        # out_ref: (1, 1, C)    f32   sigmoid channel attention for this batch
        # acc_ref: (1, C, 128)  f32   lane-wise running sum over HW
        k = pl.program_id(1)

        @pl.when(k == 0)
        def _():
            acc_ref[...] = jnp.zeros_like(acc_ref)

        if need_mask:
            # Boundary tile may contain stale VMEM lanes past HW; zero them.
            # Non-boundary tiles: threshold >= 128 for every chunk -> mask all-true.
            valid = hw_true - k * thw                       # lanes valid in this tile
            lane = jax.lax.broadcasted_iota(jnp.int32, acc_ref.shape, 2)  # (1, C, 128)
            partial = jnp.where(lane < valid, x_ref[:, :, 0:128], 0.0)
            for j in range(1, n_lane_chunks):               # static unroll, VPU-only
                chunk = x_ref[:, :, j * 128:(j + 1) * 128]
                partial = partial + jnp.where(lane < (valid - j * 128), chunk, 0.0)
        else:
            # Lane-wise partial sums: pure VPU adds, cross-lane reduce deferred.
            partial = x_ref[:, :, 0:128]
            for j in range(1, n_lane_chunks):               # static unroll over 128-lane chunks
                partial = partial + x_ref[:, :, j * 128:(j + 1) * 128]
        acc_ref[...] += partial

        @pl.when(k == pl.num_programs(1) - 1)
        def _():
            # Single cross-lane reduce (XLU) + mean scale, then the tiny matmul chain.
            pooled = jnp.sum(acc_ref[...], axis=-1) * inv_hw          # (1, C)
            latents = jnp.maximum(
                jnp.dot(pooled, w1_ref[...],
                        preferred_element_type=jnp.float32), 0.0)     # (1, L*D)
            att = jnp.dot(latents, w2_ref[...],
                          preferred_element_type=jnp.float32)         # (1, C)
            out_ref[...] = jax.nn.sigmoid(att)[:, None, :]            # (1, 1, C)

    return kernel


def multi_latent_attention(x, w_latents, w_combine, num_latents):
    """x: (B, C, H, W) f32.  Returns (B, C, 1, 1) channel attention weights."""
    B, C, H, W = x.shape
    LD, C_in = w_latents.shape
    assert C_in == C
    D = LD // num_latents
    assert w_combine.shape == (C, D)
    HW = H * W

    # Fold mean-over-latents + fc_combine into one weight; pre-transpose fc_latents.
    w1 = jnp.asarray(w_latents, jnp.float32).T                                   # (C, L*D)
    w2 = jnp.tile(jnp.asarray(w_combine, jnp.float32).T, (num_latents, 1)) \
        / jnp.float32(num_latents)                                               # (L*D, C)

    # Tile the HW axis; boundary handled in-kernel (no wrapper-side pad copy of x).
    thw = _pick_thw(HW, C)
    n_k = pl.cdiv(HW, thw)
    need_mask = (HW % thw) != 0

    x_flat = x.reshape(B, C, HW).astype(jnp.float32)
    kernel = _make_mla_kernel(HW, thw, need_mask)

    att = pl.pallas_call(
        kernel,
        out_shape=jax.ShapeDtypeStruct((B, 1, C), jnp.float32),
        grid_spec=pltpu.PrefetchScalarGridSpec(
            num_scalar_prefetch=0,
            grid=(B, n_k),
            in_specs=[
                pl.BlockSpec((1, C, thw), lambda b, k: (b, 0, k)),   # x tile (pipelined)
                pl.BlockSpec((C, LD), lambda b, k: (0, 0)),          # fc_latents^T (resident)
                pl.BlockSpec((LD, C), lambda b, k: (0, 0)),          # folded combine (resident)
            ],
            out_specs=pl.BlockSpec((1, 1, C), lambda b, k: (b, 0, 0)),
            scratch_shapes=[pltpu.VMEM((1, C, 128), jnp.float32)],
        ),
        compiler_params=pltpu.CompilerParams(
            dimension_semantics=("parallel", "arbitrary")),
    )(x_flat, w1, w2)

    return att.reshape(B, C, 1, 1)


def _reference(x, w_latents, w_combine, num_latents):
    """Pure-JAX reference mirroring the PyTorch forward."""
    B, C, _, _ = x.shape
    D = w_latents.shape[0] // num_latents
    pooled = jnp.mean(x, axis=(2, 3))                        # (B, C)
    latents = jnp.maximum(pooled @ w_latents.T, 0.0)         # (B, L*D)
    aggregated = latents.reshape(B, num_latents, D).mean(1)  # (B, D)
    att = jax.nn.sigmoid(aggregated @ w_combine.T)           # (B, C)
    return att.reshape(B, C, 1, 1)


if __name__ == "__main__":
    # Module config: channels=64, num_latents=4, reduction=16 -> latent_dim=4
    B, C = 2, 64
    num_latents, reduction = 4, 16
    latent_dim = C // reduction

    key = jax.random.PRNGKey(0)
    kx, k1, k2, kx2 = jax.random.split(key, 4)

    # PyTorch Linear layout: (out_features, in_features)
    w_latents = 0.1 * jax.random.normal(
        k1, (num_latents * latent_dim, C), dtype=jnp.float32)
    w_combine = 0.1 * jax.random.normal(
        k2, (C, latent_dim), dtype=jnp.float32)

    # Case 1: tile-aligned spatial size (16x16 -> HW multiple of 128).
    x = jax.random.normal(kx, (B, C, 16, 16), dtype=jnp.float32)
    out = jax.block_until_ready(
        multi_latent_attention(x, w_latents, w_combine, num_latents))
    ref = _reference(x, w_latents, w_combine, num_latents)
    assert out.shape == (B, C, 1, 1)
    assert jnp.allclose(out, ref, atol=1e-5, rtol=1e-5), "mismatch vs reference (aligned)"

    # Case 2: non-aligned spatial size (10x10 -> exercises in-kernel boundary mask).
    x2 = jax.random.normal(kx2, (B, C, 10, 10), dtype=jnp.float32)
    out2 = jax.block_until_ready(
        multi_latent_attention(x2, w_latents, w_combine, num_latents))
    ref2 = _reference(x2, w_latents, w_combine, num_latents)
    assert jnp.allclose(out2, ref2, atol=1e-5, rtol=1e-5), "mismatch vs reference (masked)"

    print("KERNEL_OK")
</pallas_src>

<mosaic_0001>
module attributes {stable_mosaic.version = 11 : i64} {
  func.func @kernel(%arg0: i32, %arg1: i32, %arg2: memref<1x64x256xf32, #tpu.memory_space<vmem>>, %arg3: memref<64x16xf32, #tpu.memory_space<vmem>>, %arg4: memref<16x64xf32, #tpu.memory_space<vmem>>, %arg5: memref<1x1x64xf32, #tpu.memory_space<vmem>>, %arg6: memref<1x64x128xf32, #tpu.memory_space<vmem>>) attributes {dimension_semantics = [#tpu.dimension_semantics<parallel>, #tpu.dimension_semantics<arbitrary>], iteration_bounds = array<i64: 2, 1>, scalar_prefetch = 0 : i64, scratch_operands = 1 : i64, tpu.core_type = #tpu.core_type<tc>, window_params = [{transform_indices = @transform_0, window_bounds = array<i64: 1, 64, 256>}, {pipeline_mode = #tpu.pipeline_mode<synchronous>, transform_indices = @transform_1, window_bounds = array<i64: 64, 16>}, {pipeline_mode = #tpu.pipeline_mode<synchronous>, transform_indices = @transform_2, window_bounds = array<i64: 16, 64>}, {transform_indices = @transform_3, window_bounds = array<i64: 1, 1, 64>}]} {
    %c0_i32 = arith.constant 0 : i32
    %0 = arith.cmpi eq, %arg1, %c0_i32 : i32
    %1 = arith.extui %0 : i1 to i32
    %c0_i32_0 = arith.constant 0 : i32
    %2 = arith.cmpi ne, %1, %c0_i32_0 : i32
    scf.if %2 {
      %cst = arith.constant 0.000000e+00 : f32
      %12 = vector.broadcast %cst : f32 to vector<1x64x128xf32>
      %c0_13 = arith.constant 0 : index
      %c0_14 = arith.constant 0 : index
      %c0_15 = arith.constant 0 : index
      %13 = vector.load %arg6[%c0_13, %c0_14, %c0_15] : memref<1x64x128xf32, #tpu.memory_space<vmem>>, vector<1x64x128xf32>
      tpu.vector_store %arg6[%c0_13, %c0_14, %c0_15], %12 {strides = array<i32>} : memref<1x64x128xf32, #tpu.memory_space<vmem>>, vector<1x64x128xf32>,
    } else {
    }
    %c0 = arith.constant 0 : index
    %c0_1 = arith.constant 0 : index
    %c0_2 = arith.constant 0 : index
    %3 = vector.load %arg2[%c0, %c0_1, %c0_2] : memref<1x64x256xf32, #tpu.memory_space<vmem>>, vector<1x64x128xf32>
    %c0_3 = arith.constant 0 : index
    %c0_4 = arith.constant 0 : index
    %c128 = arith.constant 128 : index
    %4 = vector.load %arg2[%c0_3, %c0_4, %c128] : memref<1x64x256xf32, #tpu.memory_space<vmem>>, vector<1x64x128xf32>
    %5 = arith.addf %3, %4 : vector<1x64x128xf32>
    %c0_5 = arith.constant 0 : index
    %c0_6 = arith.constant 0 : index
    %c0_7 = arith.constant 0 : index
    %6 = vector.load %arg6[%c0_5, %c0_6, %c0_7] : memref<1x64x128xf32, #tpu.memory_space<vmem>>, vector<1x64x128xf32>
    %7 = arith.addf %6, %5 : vector<1x64x128xf32>
    %c0_8 = arith.constant 0 : index
    %c0_9 = arith.constant 0 : index
    %c0_10 = arith.constant 0 : index
    %8 = vector.load %arg6[%c0_8, %c0_9, %c0_10] : memref<1x64x128xf32, #tpu.memory_space<vmem>>, vector<1x64x128xf32>
    tpu.vector_store %arg6[%c0_8, %c0_9, %c0_10], %7 {strides = array<i32>} : memref<1x64x128xf32, #tpu.memory_space<vmem>>, vector<1x64x128xf32>,
    %c0_i32_11 = arith.constant 0 : i32
    %9 = arith.cmpi eq, %arg1, %c0_i32_11 : i32
    %10 = arith.extui %9 : i1 to i32
    %c0_i32_12 = arith.constant 0 : i32
    %11 = arith.cmpi ne, %10, %c0_i32_12 : i32
    scf.if %11 {
      %c0_13 = arith.constant 0 : index
      %c0_14 = arith.constant 0 : index
      %c0_15 = arith.constant 0 : index
      %12 = vector.load %arg6[%c0_13, %c0_14, %c0_15] : memref<1x64x128xf32, #tpu.memory_space<vmem>>, vector<1x64x128xf32>
      %cst = arith.constant dense<0.000000e+00> : vector<1x64xf32>
      %13 = vector.multi_reduction <add>, %12, %cst [2] : vector<1x64x128xf32> to vector<1x64xf32>
      %cst_16 = arith.constant 3.906250e-03 : f32
      %14 = vector.broadcast %cst_16 : f32 to vector<1x64xf32>
      %15 = arith.mulf %13, %14 : vector<1x64xf32>
      %c0_17 = arith.constant 0 : index
      %c0_18 = arith.constant 0 : index
      %16 = vector.load %arg3[%c0_17, %c0_18] : memref<64x16xf32, #tpu.memory_space<vmem>>, vector<64x16xf32>
      %cst_19 = arith.constant dense<0.000000e+00> : vector<1x16xf32>
      %17 = tpu.matmul %15, %16, %cst_19 {dimension_numbers = #tpu.dot_dimension_numbers<[1], [0], [0], [1], [0, 0, 1, 1], [], []>} : vector<1x64xf32>, vector<64x16xf32>, vector<1x16xf32> -> vector<1x16xf32>
      %cst_20 = arith.constant 0.000000e+00 : f32
      %18 = vector.broadcast %cst_20 : f32 to vector<1x16xf32>
      %19 = arith.maximumf %17, %18 : vector<1x16xf32>
      %c0_21 = arith.constant 0 : index
      %c0_22 = arith.constant 0 : index
      %20 = vector.load %arg4[%c0_21, %c0_22] : memref<16x64xf32, #tpu.memory_space<vmem>>, vector<16x64xf32>
      %cst_23 = arith.constant dense<0.000000e+00> : vector<1x64xf32>
      %21 = tpu.matmul %19, %20, %cst_23 {dimension_numbers = #tpu.dot_dimension_numbers<[1], [0], [0], [1], [0, 0, 1, 1], [], []>} : vector<1x16xf32>, vector<16x64xf32>, vector<1x64xf32> -> vector<1x64xf32>
      %22 = arith.negf %21 : vector<1x64xf32>
      %23 = math.exp %22 : vector<1x64xf32>
      %cst_24 = arith.constant 1.000000e+00 : f32
      %24 = vector.broadcast %cst_24 : f32 to vector<1x64xf32>
      %25 = arith.addf %24, %23 : vector<1x64xf32>
      %26 = arith.divf %24, %25 : vector<1x64xf32>
      %27 = vector.shape_cast %26 : vector<1x64xf32> to vector<1x1x64xf32>
      %c0_25 = arith.constant 0 : index
      %c0_26 = arith.constant 0 : index
      %c0_27 = arith.constant 0 : index
      %28 = vector.load %arg5[%c0_25, %c0_26, %c0_27] : memref<1x1x64xf32, #tpu.memory_space<vmem>>, vector<1x1x64xf32>
      tpu.vector_store %arg5[%c0_25, %c0_26, %c0_27], %27 {strides = array<i32>} : memref<1x1x64xf32, #tpu.memory_space<vmem>>, vector<1x1x64xf32>,
    } else {
    }
    return
  }
  func.func @transform_0(%arg0: i32, %arg1: i32) -> (i32, i32, i32) {
    %c0_i32 = arith.constant 0 : i32
    %c0_i32_0 = arith.constant 0 : i32
    return %arg0, %c0_i32, %arg1 : i32, i32, i32
  }
  func.func @transform_1(%arg0: i32, %arg1: i32) -> (i32, i32) {
    %c0_i32 = arith.constant 0 : i32
    %c0_i32_0 = arith.constant 0 : i32
    %c0_i32_1 = arith.constant 0 : i32
    return %c0_i32, %c0_i32_0 : i32, i32
  }
  func.func @transform_2(%arg0: i32, %arg1: i32) -> (i32, i32) {
    %c0_i32 = arith.constant 0 : i32
    %c0_i32_0 = arith.constant 0 : i32
    %c0_i32_1 = arith.constant 0 : i32
    return %c0_i32, %c0_i32_0 : i32, i32
  }
  func.func @transform_3(%arg0: i32, %arg1: i32) -> (i32, i32, i32) {
    %c0_i32 = arith.constant 0 : i32
    %c0_i32_0 = arith.constant 0 : i32
    %c0_i32_1 = arith.constant 0 : i32
    return %arg0, %c0_i32, %c0_i32_0 : i32, i32, i32
  }
}

</mosaic_0001>

<llo_original>
// kernel: tpu_custom_call.1
$region0: #{tpu_custom_call.1}
  #allocation0 [shape = 'u32[]', space=smem, size = 0x4, offset = 0x4, fixed_abs, tag = 'smem constant byte address 0x4 - core index']
  #allocation1 [shape = 'u32[72,128]{1,0:T(1,128)}', space=vmem, size = 0x9000, scoped, tag = 'internal scratch']
  #allocation2 [shape = 'f32[1,64,128]{2,1,0:T(8,128)}', space=vmem, size = 0x8000, scoped, tag = 'scratch operand']
  %s0 = inlined_call_operand.hbm [shape: f32[2,64,256], index: 0, kind: input, shape index: {}]
  %s1 = inlined_call_operand.vmem [shape: f32[64,16], index: 1, kind: input, shape index: {}]
  %s2 = inlined_call_operand.vmem [shape: f32[16,64], index: 2, kind: input, shape index: {}]
  %s3 = inlined_call_operand.hbm [shape: f32[2,1,64], index: 3, kind: output, shape index: {}]
  %s4 = sld [smem:[#allocation0]]
  $region57: #{tpu_custom_call.1} parent=0
    _
  %s6 = ssub.s32 1, %s4
  %s7 = scalar_select 0, %s6, %s4
  $region1: #{tpu_custom_call.1} parent=0
    #allocation3 [shape = 'u8[131072]{0}', space=vmem, size = 0x20000, scoped, tag = 'input window, operand 0']
    #allocation4 [shape = 's32[2]{0}', space=sflag, size = 0x8, scoped, tag = 'scoped memory for tpu_custom_call.1']
    #allocation5 [shape = 's32[2]{0}', space=sflag, size = 0x8, scoped, tag = 'scoped memory for tpu_custom_call.1']
    #allocation6 [shape = 'u8[1024]{0}', space=vmem, size = 0x400, scoped, tag = 'output window, operand 0']
    %8 = vsyncpa [#allocation4], 0
    %s9 = scalar_lea.sflag [#allocation4], 1
    %10 = vsyncpa %s9, 0
    %11 = vsyncpa [#allocation5], 0
    %s12 = scalar_lea.sflag [#allocation5], 1
    %13 = vsyncpa %s12, 0
    loop: start=0, step=1, limit=4
    $region2: #{tpu_custom_call.1} parent=1 // loop_pre_header
      _
    $region3: #{tpu_custom_call.1} parent=1 // loop_header
      %s15 = sphi 0, %s19
      %p16 = scmp.ge.s32.totalorder %s15, 4
      %s22 = sphi 0, %s34
      %s23 = sphi 0, %s30
      %s24 = sphi 0, %s22
      %s25 = sphi 0, %s23
      %s26 = sphi 0, %s24
      %s27 = sphi 0, %s25
      %s39 = sphi 0, %s41
      %s42 = sphi 0, %s39
      %s43 = sphi 0, %s42
      %s59 = sphi 0, %s43
      %s63 = sphi 0, %s63
      %s65 = sphi 0, %s63
      %s66 = sphi 0, %s65
      %s80 = sphi 0, %s66
      %s84 = sphi 0, %s84
      %s86 = sphi 0, %s84
      %s87 = sphi 0, %s86
      %s101 = sphi 0, %s87
      %s107 = sphi 0, %s109
      %s110 = sphi 0, %s107
      %s111 = sphi 0, %s110
      %s127 = sphi 0, %s111
    $region4: #{tpu_custom_call.1} parent=1 // loop_header_branch
      %18 = sbr.rel (%p16) target = $region8
    $region5: #{tpu_custom_call.1} parent=1 // loop_body
      %s20 = ssub.s32 %s15, 1
      %s21 = ssub.s32 %s15, 2
      %s28 = sadd.s32 1, %s23
      %p29 = scmp.ge.s32.totalorder %s28, 1
      %s30 = scalar_select %p29, 0, %s28
      %s31 = sadd.s32 1, %s22
      %s32 = scalar_select %p29, %s31, %s22
      %p33 = scmp.ge.s32.totalorder %s32, 2
      %s34 = scalar_select %p33, 0, %s32
      %s35 = ssub.s32 %s22, %s34
      %s36 = ssub.s32 %s23, %s30
      %s37 = sor.u32 %s35, %s36
      %p38 = scmp.eq.s32.totalorder %s37, 0
      %s40 = sadd.s32 %s39, 1
      %s41 = scalar_select %p38, %s39, %s40
      %p44 = pneg %p38
      %p45 = scmp.eq.s32.totalorder %s15, 1
      %p46 = por %p44, %p45
      %p47 = scmp.ne.s32.totalorder %s39, %s42
      %p48 = scmp.eq.s32.totalorder %s15, 0
      %p49 = por %p47, %p48
      %p50 = scmp.ne.s32.totalorder %s39, %s42
      %p51 = scmp.eq.s32.totalorder %s20, 1
      %p52 = por %p50, %p51
      %p53 = scmp.ne.s32.totalorder %s42, %s43
      %p54 = scmp.eq.s32.totalorder %s20, 0
      %p55 = por %p53, %p54
      %p56 = scmp.ne.s32.totalorder %s42, %s43
      %p57 = scmp.eq.s32.totalorder %s21, 1
      %p58 = por %p56, %p57
      %p60 = scmp.ne.s32.totalorder %s43, %s59
      %p61 = scmp.eq.s32.totalorder %s21, 0
      %p62 = por %p60, %p61
      %s64 = sadd.s32 %s63, 1
      %p67 = scmp.eq.s32.totalorder %s15, 1
      %p68 = scmp.ne.s32.totalorder %s63, %s65
      %p69 = scmp.eq.s32.totalorder %s15, 0
      %p70 = por %p68, %p69
      %p71 = scmp.ne.s32.totalorder %s63, %s65
      %p72 = scmp.eq.s32.totalorder %s20, 1
      %p73 = por %p71, %p72
      %p74 = scmp.ne.s32.totalorder %s65, %s66
      %p75 = scmp.eq.s32.totalorder %s20, 0
      %p76 = por %p74, %p75
      %p77 = scmp.ne.s32.totalorder %s65, %s66
      %p78 = scmp.eq.s32.totalorder %s21, 1
      %p79 = por %p77, %p78
      %p81 = scmp.ne.s32.totalorder %s66, %s80
      %p82 = scmp.eq.s32.totalorder %s21, 0
      %p83 = por %p81, %p82
      %s85 = sadd.s32 %s84, 1
      %p88 = scmp.eq.s32.totalorder %s15, 1
      %p89 = scmp.ne.s32.totalorder %s84, %s86
      %p90 = scmp.eq.s32.totalorder %s15, 0
      %p91 = por %p89, %p90
      %p92 = scmp.ne.s32.totalorder %s84, %s86
      %p93 = scmp.eq.s32.totalorder %s20, 1
      %p94 = por %p92, %p93
      %p95 = scmp.ne.s32.totalorder %s86, %s87
      %p96 = scmp.eq.s32.totalorder %s20, 0
      %p97 = por %p95, %p96
      %p98 = scmp.ne.s32.totalorder %s86, %s87
      %p99 = scmp.eq.s32.totalorder %s21, 1
      %p100 = por %p98, %p99
      %p102 = scmp.ne.s32.totalorder %s87, %s101
      %p103 = scmp.eq.s32.totalorder %s21, 0
      %p104 = por %p102, %p103
      %s105 = ssub.s32 %s22, %s34
      %p106 = scmp.eq.s32.totalorder %s105, 0
      %s108 = sadd.s32 %s107, 1
      %s109 = scalar_select %p106, %s107, %s108
      %p112 = pneg %p106
      %p113 = scmp.eq.s32.totalorder %s15, 1
      %p114 = por %p112, %p113
      %p115 = scmp.ne.s32.totalorder %s107, %s110
      %p116 = scmp.eq.s32.totalorder %s15, 0
      %p117 = por %p115, %p116
      %p118 = scmp.ne.s32.totalorder %s107, %s110
      %p119 = scmp.eq.s32.totalorder %s20, 1
      %p120 = por %p118, %p119
      %p121 = scmp.ne.s32.totalorder %s110, %s111
      %p122 = scmp.eq.s32.totalorder %s20, 0
      %p123 = por %p121, %p122
      %p124 = scmp.ne.s32.totalorder %s110, %s111
      %p125 = scmp.eq.s32.totalorder %s21, 1
      %p126 = por %p124, %p125
      %p128 = scmp.ne.s32.totalorder %s111, %s127
      %p129 = scmp.eq.s32.totalorder %s21, 0
      %p130 = por %p128, %p129
      %p131 = scmp.le.s32.totalorder 1, %s15
      %p132 = scmp.lt.s32.totalorder %s15, 3
      %p133 = pnand %p131, %p132
      %p134 = pneg %p133
      // Predicated region
      $region9: #{tpu_custom_call.1} parent=5 // pred_check
        _
      $region10: #{tpu_custom_call.1} parent=5 // pred_check_branch
        %136 = sbr.rel (%p133) target = $region12
      $region11: #{tpu_custom_call.1} parent=5 // pred_region
        %s137 = ssub.s32 %s15, 1
        // Predicated region
        $region13: #{tpu_custom_call.1} parent=11 // pred_check
          %p138 = pneg %p76
        $region14: #{tpu_custom_call.1} parent=11 // pred_check_branch
          %140 = sbr.rel (%p138) target = $region16
        $region15: #{tpu_custom_call.1} parent=11 // pred_region
          _
        $region16: #{tpu_custom_call.1} parent=11 // pred_fallthru
          _
        // Predicated region
        $region17: #{tpu_custom_call.1} parent=11 // pred_check
          %p141 = pneg %p97
        $region18: #{tpu_custom_call.1} parent=11 // pred_check_branch
          %143 = sbr.rel (%p141) target = $region20
        $region19: #{tpu_custom_call.1} parent=11 // pred_region
          _
        $region20: #{tpu_custom_call.1} parent=11 // pred_fallthru
          _
      $region12: #{tpu_custom_call.1} parent=5 // pred_fallthru
        _
      %p144 = scmp.lt.s32.totalorder %s15, 2
      // Predicated region
      $region21: #{tpu_custom_call.1} parent=5 // pred_check
        %p145 = pneg %p144
      $region22: #{tpu_custom_call.1} parent=5 // pred_check_branch
        %147 = sbr.rel (%p145) target = $region24
      $region23: #{tpu_custom_call.1} parent=5 // pred_region
        // Predicated region
        $region25: #{tpu_custom_call.1} parent=23 // pred_check
          %p148 = pneg %p49
        $region26: #{tpu_custom_call.1} parent=23 // pred_check_branch
          %150 = sbr.rel (%p148) target = $region28
        $region27: #{tpu_custom_call.1} parent=23 // pred_region
          %s151 = sand.u32 %s39, 1
          %s152 = scalar_lea.sflag [#allocation4], %s151
          %s153 = sand.u32 %s39, 1
          %s154 = smul.addr %s153, 128
          %s155 = scalar_lea.vmem [#allocation3], %s154
          %s156 = smul.u32 2, %s23
          %158 = vsyncadd %s152, 0
          %s159 = smul.addr %s22, 16
          %s160 = sadd.s32 %s156, %s159
          %s161 = smul.addr %s160, 8
          %s162 = scalar_lea.hbm %s0, %s161
          %s163 = sshll.u32 %s162, 4
          %s164 = int_to_ptr.hbm [resolvable:$true] %s163
          %s165 = sshll.u32 %s155, 4
          %s166 = int_to_ptr.vmem [resolvable:$true] %s165
          %171 = dma.hbm_to_vmem [thread:$0]  %s164, 2048, %s166, %s152, 256, 256, 16
        $region28: #{tpu_custom_call.1} parent=23 // pred_fallthru
          _
      $region24: #{tpu_custom_call.1} parent=5 // pred_fallthru
        _
      %p172 = scmp.le.s32.totalorder 1, %s15
      %p173 = scmp.lt.s32.totalorder %s15, 3
      %p174 = pnand %p172, %p173
      %p175 = pneg %p174
      // Predicated region
      $region29: #{tpu_custom_call.1} parent=5 // pred_check
        _
      $region30: #{tpu_custom_call.1} parent=5 // pred_check_branch
        %177 = sbr.rel (%p174) target = $region32
      $region31: #{tpu_custom_call.1} parent=5 // pred_region
        %s178 = ssub.s32 %s15, 1
        %s179 = sand.u32 %s42, 1
        %s180 = scalar_lea.sflag [#allocation4], %s179
        %s181 = sand.u32 %s42, 1
        %s182 = smul.addr %s181, 128
        %s183 = scalar_lea.vmem [#allocation3], %s182
        // Predicated region
        $region33: #{tpu_custom_call.1} parent=31 // pred_check
          %p184 = pneg %p55
        $region34: #{tpu_custom_call.1} parent=31 // pred_check_branch
          %186 = sbr.rel (%p184) target = $region36
        $region35: #{tpu_custom_call.1} parent=31 // pred_region
          %188 = dma.done %s180, 2048
        $region36: #{tpu_custom_call.1} parent=31 // pred_fallthru
          _
        %s189 = sand.u32 %s42, 1
        %s190 = scalar_lea.sflag [#allocation4], %s189
        %s191 = sand.u32 %s42, 1
        %s192 = smul.addr %s191, 128
        %s193 = scalar_lea.vmem [#allocation3], %s192
        %p194 = pneg %p55
        %p195 = pneg %p52
        %p196 = pneg %p76
        %p197 = pneg %p73
        %p198 = pneg %p97
        %p199 = pneg %p94
        %p200 = pneg %p123
        %p201 = pneg %p120
        %s202 = sand.u32 %s110, 1
        %s203 = scalar_lea.sflag [#allocation5], %s202
        %s204 = sand.u32 %s110, 1
        %s205 = scalar_lea.vmem [#allocation6], %s204
        %s206 = smul.u32 2, %s25
        %p207 = scmp.eq.s32.totalorder %s25, 0
        // Predicated region
        $region37: #{tpu_custom_call.1} parent=31 // pred_check
          %p208 = pneg %p207
        $region38: #{tpu_custom_call.1} parent=31 // pred_check_branch
          %210 = sbr.rel (%p208) target = $region40
        $region39: #{tpu_custom_call.1} parent=31 // pred_region
          %211 = vst [vmem:[#allocation2] sm:$0xff] 0.0
          %212 = vst [vmem:[#allocation2 + $0x8] sm:$0xff] 0.0
          %213 = vst [vmem:[#allocation2 + $0x10] sm:$0xff] 0.0
          %214 = vst [vmem:[#allocation2 + $0x18] sm:$0xff] 0.0
          %215 = vst [vmem:[#allocation2 + $0x20] sm:$0xff] 0.0
          %216 = vst [vmem:[#allocation2 + $0x28] sm:$0xff] 0.0
          %217 = vst [vmem:[#allocation2 + $0x30] sm:$0xff] 0.0
          %218 = vst [vmem:[#allocation2 + $0x38] sm:$0xff] 0.0
        $region40: #{tpu_custom_call.1} parent=31 // pred_fallthru
          _
        %v219 = vld [vmem:[%s183] sm:$0xff]
        %v220 = vld [vmem:[%s183 + $0x10] sm:$0xff]
        %v221 = vld [vmem:[%s183 + $0x20] sm:$0xff]
        %v222 = vld [vmem:[%s183 + $0x30] sm:$0xff]
        %v223 = vld [vmem:[%s183 + $0x40] sm:$0xff]
        %v224 = vld [vmem:[%s183 + $0x50] sm:$0xff]
        %v225 = vld [vmem:[%s183 + $0x60] sm:$0xff]
        %v226 = vld [vmem:[%s183 + $0x70] sm:$0xff]
        %v227 = vld [vmem:[%s183 + $0x8] sm:$0xff]
        %v228 = vld [vmem:[%s183 + $0x18] sm:$0xff]
        %v229 = vld [vmem:[%s183 + $0x28] sm:$0xff]
        %v230 = vld [vmem:[%s183 + $0x38] sm:$0xff]
        %v231 = vld [vmem:[%s183 + $0x48] sm:$0xff]
        %v232 = vld [vmem:[%s183 + $0x58] sm:$0xff]
        %v233 = vld [vmem:[%s183 + $0x68] sm:$0xff]
        %v234 = vld [vmem:[%s183 + $0x78] sm:$0xff]
        %v235 = vadd.f32 %v219, %v227
        %v236 = vadd.f32 %v220, %v228
        %v237 = vadd.f32 %v221, %v229
        %v238 = vadd.f32 %v222, %v230
        %v239 = vadd.f32 %v223, %v231
        %v240 = vadd.f32 %v224, %v232
        %v241 = vadd.f32 %v225, %v233
        %v242 = vadd.f32 %v226, %v234
        %v243 = vld [vmem:[#allocation2] sm:$0xff]
        %v244 = vld [vmem:[#allocation2 + $0x8] sm:$0xff]
        %v245 = vld [vmem:[#allocation2 + $0x10] sm:$0xff]
        %v246 = vld [vmem:[#allocation2 + $0x18] sm:$0xff]
        %v247 = vld [vmem:[#allocation2 + $0x20] sm:$0xff]
        %v248 = vld [vmem:[#allocation2 + $0x28] sm:$0xff]
        %v249 = vld [vmem:[#allocation2 + $0x30] sm:$0xff]
        %v250 = vld [vmem:[#allocation2 + $0x38] sm:$0xff]
        %v251 = vadd.f32 %v243, %v235
        %v252 = vadd.f32 %v244, %v236
        %v253 = vadd.f32 %v245, %v237
        %v254 = vadd.f32 %v246, %v238
        %v255 = vadd.f32 %v247, %v239
        %v256 = vadd.f32 %v248, %v240
        %v257 = vadd.f32 %v249, %v241
        %v258 = vadd.f32 %v250, %v242
        %259 = vst [vmem:[#allocation2] sm:$0xff] %v251
        %260 = vst [vmem:[#allocation2 + $0x8] sm:$0xff] %v252
        %261 = vst [vmem:[#allocation2 + $0x10] sm:$0xff] %v253
        %262 = vst [vmem:[#allocation2 + $0x18] sm:$0xff] %v254
        %263 = vst [vmem:[#allocation2 + $0x20] sm:$0xff] %v255
        %264 = vst [vmem:[#allocation2 + $0x28] sm:$0xff] %v256
        %265 = vst [vmem:[#allocation2 + $0x30] sm:$0xff] %v257
        %266 = vst [vmem:[#allocation2 + $0x38] sm:$0xff] %v258
        // Predicated region
        $region41: #{tpu_custom_call.1} parent=31 // pred_check
          %p267 = pneg %p207
        $region42: #{tpu_custom_call.1} parent=31 // pred_check_branch
          %269 = sbr.rel (%p267) target = $region44
        $region43: #{tpu_custom_call.1} parent=31 // pred_region
          %v270 = vld [vmem:[#allocation2] sm:$0xff]
          %v271 = vld [vmem:[#allocation2 + $0x8] sm:$0xff]
          %v272 = vld [vmem:[#allocation2 + $0x10] sm:$0xff]
          %v273 = vld [vmem:[#allocation2 + $0x18] sm:$0xff]
          %v274 = vld [vmem:[#allocation2 + $0x20] sm:$0xff]
          %v275 = vld [vmem:[#allocation2 + $0x28] sm:$0xff]
          %v276 = vld [vmem:[#allocation2 + $0x30] sm:$0xff]
          %v277 = vld [vmem:[#allocation2 + $0x38] sm:$0xff]
          %278 = vadd.xlane.f32.xlu0 %v270
          %v279 = vpop.xlane.xlu0 %278
          %280 = vadd.xlane.f32.xlu0 %v271
          %v281 = vpop.xlane.xlu0 %280
          %282 = vadd.xlane.f32.xlu0 %v272
          %v283 = vpop.xlane.xlu0 %282
          %284 = vadd.xlane.f32.xlu0 %v273
          %v285 = vpop.xlane.xlu0 %284
          %286 = vadd.xlane.f32.xlu0 %v274
          %v287 = vpop.xlane.xlu0 %286
          %288 = vadd.xlane.f32.xlu0 %v275
          %v289 = vpop.xlane.xlu0 %288
          %290 = vadd.xlane.f32.xlu0 %v276
          %v291 = vpop.xlane.xlu0 %290
          %292 = vadd.xlane.f32.xlu0 %v277
          %v293 = vpop.xlane.xlu0 %292
          %v294 = vmul.f32 %v279, 0.00390625
          %v295 = vmul.f32 %v281, 0.00390625
          %v296 = vmul.f32 %v283, 0.00390625
          %v297 = vmul.f32 %v285, 0.00390625
          %v298 = vmul.f32 %v287, 0.00390625
          %v299 = vmul.f32 %v289, 0.00390625
          %v300 = vmul.f32 %v291, 0.00390625
          %v301 = vmul.f32 %v293, 0.00390625
          %v302 = vld [vmem:[%s1] sm:$0xff]
          %v303 = vld [vmem:[%s1 + $0x8] sm:$0xff]
          %v304 = vld [vmem:[%s1 + $0x10] sm:$0xff]
          %v305 = vld [vmem:[%s1 + $0x18] sm:$0xff]
          %v306 = vld [vmem:[%s1 + $0x20] sm:$0xff]
          %v307 = vld [vmem:[%s1 + $0x28] sm:$0xff]
          %v308 = vld [vmem:[%s1 + $0x30] sm:$0xff]
          %v309 = vld [vmem:[%s1 + $0x38] sm:$0xff]
          %v318 = vlaneseq
          %v319 = vand.u32 %v318, 127
          %v320 = vperm.slane %v294, %v319
          %v321 = vadd.s32 %v319, 4294967288
          %v322 = vperm.slane %v295, %v321
          %vm323 = vcmask 130112
          %v324 = vsel %vm323, %v322, %v320
          %v325 = vadd.s32 %v319, 4294967280
          %v326 = vperm.slane %v296, %v325
          %vm327 = vcmask 195712
          %v328 = vsel %vm327, %v326, %v324
          %v329 = vadd.s32 %v319, 4294967272
          %v330 = vperm.slane %v297, %v329
          %vm331 = vcmask 261312
          %v332 = vsel %vm331, %v330, %v328
          %v333 = vadd.s32 %v319, 4294967264
          %v334 = vperm.slane %v298, %v333
          %vm335 = vcmask 326912
          %v336 = vsel %vm335, %v334, %v332
          %v337 = vadd.s32 %v319, 4294967256
          %v338 = vperm.slane %v299, %v337
          %vm339 = vcmask 392512
          %v340 = vsel %vm339, %v338, %v336
          %v341 = vadd.s32 %v319, 4294967248
          %v342 = vperm.slane %v300, %v341
          %vm343 = vcmask 458112
          %v344 = vsel %vm343, %v342, %v340
          %v345 = vadd.s32 %v319, 4294967240
          %v346 = vperm.slane %v301, %v345
          %vm347 = vcmask 523712
          %v348 = vsel %vm347, %v346, %v344
          %vm349 = vcmask 523264
          %v350 = vsel %vm349, %v348, 0
          %352 = vmatpush.msra.mxu0 0.0
          %353 = vmatpush.msra.mxu0 0.0
          %354 = vmatpush.msra.mxu0 0.0
          %355 = vmatpush.msra.mxu0 0.0
          %356 = vmatpush.msra.mxu0 0.0
          %357 = vmatpush.msra.mxu0 0.0
          %358 = vmatpush.msra.mxu0 0.0
          %359 = vmatpush.msra.mxu0 0.0
          %360 = vmatpush.msra.mxu0 %v309
          %361 = vmatpush.msra.mxu0 %v308
          %362 = vmatpush.msra.mxu0 %v307
          %363 = vmatpush.msra.mxu0 %v306
          %364 = vmatpush.msra.mxu0 %v305
          %365 = vmatpush.msra.mxu0 %v304
          %366 = vmatpush.msra.mxu0 %v303
          %367 = vmatpush.msra.mxu0 %v302
          %368 = vmatmul.f32.gmra.mxu0 %v350
          %v369 = vpop.f32.mrf.mxu0
          %v370 = vadd.f32 0.0, %v369
          %371 = vdwg.mxu0
          %v372 = vmax.f32 %v370, 0.0
          %v373 = vld [vmem:[%s2] sm:$0xff]
          %v374 = vld [vmem:[%s2 + $0x8] sm:$0xff]
          %vm375 = vcmask 130048
          %v377 = vsel %vm375, %v372, 0
          %379 = vmatpush.msra.mxu0 0.0
          %380 = vmatpush.msra.mxu0 0.0
          %381 = vmatpush.msra.mxu0 0.0
          %382 = vmatpush.msra.mxu0 0.0
          %383 = vmatpush.msra.mxu0 0.0
          %384 = vmatpush.msra.mxu0 0.0
          %385 = vmatpush.msra.mxu0 0.0
          %386 = vmatpush.msra.mxu0 0.0
          %387 = vmatpush.msra.mxu0 0.0
          %388 = vmatpush.msra.mxu0 0.0
          %389 = vmatpush.msra.mxu0 0.0
          %390 = vmatpush.msra.mxu0 0.0
          %391 = vmatpush.msra.mxu0 0.0
          %392 = vmatpush.msra.mxu0 0.0
          %393 = vmatpush.msra.mxu0 %v374
          %394 = vmatpush.msra.mxu0 %v373
          %395 = vmatmul.f32.gmra.mxu0 %v377
          %v396 = vpop.f32.mrf.mxu0
          %v397 = vadd.f32 0.0, %v396
          %398 = vdwg.mxu0
          %v399 = vxor.u32 %v397, 2147483648
          %v400 = vmul.f32 %v399, 1.442695
          %v401 = vpow.pop %v400
          %v402 = vadd.f32 %v401, 1.0
          %v403 = vrcp.pop %v402
          %v404 = vmul.f32 %v402, %v403
          %v405 = vsub.f32 1.0, %v404
          %v406 = vmul.f32 %v403, %v405
          %v407 = vadd.f32 %v403, %v406
          %vm408 = vweird.f32 %v402
          %vm409 = vweird.f32 %v403
          %vm410 = vmor %vm408, %vm409
          %v411 = vsel %vm410, %v403, %v407
          %v412 = vand.u32 2147483647, %v402
          %vm413 = vcmp.eq.f32.partialorder %v412, 8.507059e+37
          %v414 = vand.u32 %v402, 2147483648
          %v415 = vor.u32 1.1754944e-38, %v414
          %v416 = vsel %vm413, %v415, %v411
          %v417 = vmul.f32 1.0, %v416
          %vm418 = vcmask 516096
          %419 = vst.msk [vmem:[%s205] sm:$0x1] %vm418, %v417
        $region44: #{tpu_custom_call.1} parent=31 // pred_fallthru
          _
        %s420 = sand.u32 %s110, 1
        %s421 = scalar_lea.sflag [#allocation5], %s420
        %s422 = sand.u32 %s110, 1
        %s423 = scalar_lea.vmem [#allocation6], %s422
        // Predicated region
        $region45: #{tpu_custom_call.1} parent=31 // pred_check
          %p424 = pneg %p120
        $region46: #{tpu_custom_call.1} parent=31 // pred_check_branch
          %426 = sbr.rel (%p424) target = $region48
        $region47: #{tpu_custom_call.1} parent=31 // pred_region
          %428 = vsyncadd %s421, 0
          %s429 = scalar_lea.hbm %s3, %s24
          %s431 = sshll.u32 %s423, 4
          %s432 = int_to_ptr.vmem [resolvable:$true] %s431
          %s433 = sshll.u32 %s429, 4
          %s434 = int_to_ptr.hbm [resolvable:$true] %s433
          %436 = dma.vmem_to_hbm [thread:$0]  %s432, 16, %s434, %s421
        $region48: #{tpu_custom_call.1} parent=31 // pred_fallthru
          _
      $region32: #{tpu_custom_call.1} parent=5 // pred_fallthru
        _
      %p437 = scmp.le.s32.totalorder 2, %s15
      // Predicated region
      $region49: #{tpu_custom_call.1} parent=5 // pred_check
        %p438 = pneg %p437
      $region50: #{tpu_custom_call.1} parent=5 // pred_check_branch
        %440 = sbr.rel (%p438) target = $region52
      $region51: #{tpu_custom_call.1} parent=5 // pred_region
        %s441 = ssub.s32 %s15, 2
        // Predicated region
        $region53: #{tpu_custom_call.1} parent=51 // pred_check
          %p442 = pneg %p126
        $region54: #{tpu_custom_call.1} parent=51 // pred_check_branch
          %444 = sbr.rel (%p442) target = $region56
        $region55: #{tpu_custom_call.1} parent=51 // pred_region
          %s445 = sand.u32 %s111, 1
          %s446 = scalar_lea.sflag [#allocation5], %s445
          %s447 = sand.u32 %s111, 1
          %s448 = scalar_lea.vmem [#allocation6], %s447
          %450 = dma.done %s446, 16
        $region56: #{tpu_custom_call.1} parent=51 // pred_fallthru
          _
      $region52: #{tpu_custom_call.1} parent=5 // pred_fallthru
        _
    $region6: #{tpu_custom_call.1} parent=1 // loop_footer
      %s19 = sadd.s32 1, %s15
    $region7: #{tpu_custom_call.1} parent=1 // loop_footer_branch
      %14 = sbr.rel target = $region3
    $region8: #{tpu_custom_call.1} parent=1 // loop_exit
      _
    %451 = vsyncpa [#allocation4], 1
    %s452 = scalar_lea.sflag [#allocation4], 1
    %453 = vsyncpa %s452, 1
    %454 = vsyncpa [#allocation5], 1
    %s455 = scalar_lea.sflag [#allocation5], 1
    %456 = vsyncpa %s455, 1

</llo_original>
